<compile_context>
chip_gen: v5e
topology: v5e:2x2
jax: 0.10.0
libtpu: 0.0.40
codegen_flags: <defaults>
</compile_context>

<pallas_src>
import jax
import jax.numpy as jnp
from jax.experimental import pallas as pl
from jax.experimental.pallas import tpu as pltpu


def _cross_attn_kernel(img_ref, txt_ref, wq_ref, bq_ref, wkv_ref, bkv_ref,
                       out_ref):
    Bc, S_i, D = img_ref.shape
    _, S_t, _ = txt_ref.shape
    in_dt = img_ref.dtype

    # Flatten batch*seq so the projections get a tall M dim (fills sublanes /
    # MXU rows) and run once per grid step.
    img = img_ref[...].reshape(Bc * S_i, D)
    txt = txt_ref[...].reshape(Bc * S_t, D)

    # Q projection (scale D^-0.5 already folded into wq/bq).
    q = (jnp.dot(img, wq_ref[...], preferred_element_type=jnp.float32)
         + bq_ref[...]).astype(in_dt).reshape(Bc, S_i, D)

    # Fused K/V projection: one (D, 2D) matmul, then static split.
    kv = (jnp.dot(txt, wkv_ref[...], preferred_element_type=jnp.float32)
          + bkv_ref[...]).reshape(Bc, S_t, 2 * D)
    k = kv[:, :, :D].astype(in_dt)
    v = kv[:, :, D:].astype(in_dt)

    # Scores: contract last dims directly (no explicit k transpose), f32 accum.
    s = jnp.einsum("bqd,bkd->bqk", q, k, preferred_element_type=jnp.float32)

    # Numerically-stable softmax in f32; divide via EUP approx reciprocal.
    m = jnp.max(s, axis=-1, keepdims=True)
    p = jnp.exp(s - m)
    w = p * pl.reciprocal(jnp.sum(p, axis=-1, keepdims=True), approx=True)

    out = jnp.einsum("bqk,bkd->bqd", w.astype(in_dt), v,
                     preferred_element_type=jnp.float32)
    out_ref[...] = out.astype(out_ref.dtype)


def prepare_params(params):
    """One-time parameter prep (outside the per-call path).

    PyTorch Linear stores W as (out, in); pre-transpose to (in, out), fold the
    attention scale into the query projection, and fuse K/V weights/biases.
    """
    D = params["wq"].shape[0]
    scale = jnp.asarray(float(D) ** -0.5, dtype=params["wq"].dtype)
    return {
        "wq_t": (params["wq"] * scale).T,                                  # (D, D)
        "bq": (params["bq"] * scale).reshape(1, D),                        # (1, D)
        "wkv_t": jnp.concatenate([params["wk"].T, params["wv"].T], axis=1),  # (D, 2D)
        "bkv": jnp.concatenate([params["bk"], params["bv"]]).reshape(1, 2 * D),
    }


def cross_modal_attention(img_feat, txt_feat, prepared, *, block_b=None):
    """img_feat: (B, S_i, D), txt_feat: (B, S_t, D) -> (B, S_i, D)."""
    B, S_i, D = img_feat.shape
    _, S_t, _ = txt_feat.shape

    if block_b is None:
        # Chunk batches to amortize the ~0.35 us/step grid overhead, but keep
        # >= 2 grid steps when B > 1 so v7x can shard across its 2 TensorCores.
        target = max(1, min(8, (B + 1) // 2))
        block_b = 1
        for c in range(target, 0, -1):
            if B % c == 0:
                block_b = c
                break
    assert B % block_b == 0, (B, block_b)
    grid = (B // block_b,)

    const2d = lambda b: (0, 0)

    # Note: for production v7x with D~768 and bf16 weights, consider
    # pipeline_mode=pl.Buffered(1) on the constant-index weight specs and an
    # explicit vmem_limit_bytes under the 64 MiB physical VMEM.
    # TODO(synk): if D stays at 32 in production, restructure for a lane-dense
    # (multiple-of-128) output last dim to avoid masked partial stores.
    return pl.pallas_call(
        _cross_attn_kernel,
        out_shape=jax.ShapeDtypeStruct((B, S_i, D), img_feat.dtype),
        grid=grid,
        in_specs=[
            pl.BlockSpec((block_b, S_i, D), lambda b: (b, 0, 0)),   # img_feat
            pl.BlockSpec((block_b, S_t, D), lambda b: (b, 0, 0)),   # txt_feat
            pl.BlockSpec((D, D), const2d),                          # Wq^T * scale
            pl.BlockSpec((1, D), const2d),                          # bq * scale
            pl.BlockSpec((D, 2 * D), const2d),                      # [Wk^T | Wv^T]
            pl.BlockSpec((1, 2 * D), const2d),                      # [bk | bv]
        ],
        out_specs=pl.BlockSpec((block_b, S_i, D), lambda b: (b, 0, 0)),
        compiler_params=pltpu.CompilerParams(
            dimension_semantics=("parallel",)),
    )(img_feat, txt_feat, prepared["wq_t"], prepared["bq"],
      prepared["wkv_t"], prepared["bkv"])


def _reference(img_feat, txt_feat, params):
    """Pure-JAX mirror of the PyTorch forward (for correctness check)."""
    D = img_feat.shape[-1]
    q = img_feat @ params["wq"].T + params["bq"]
    k = txt_feat @ params["wk"].T + params["bk"]
    v = txt_feat @ params["wv"].T + params["bv"]
    attn = (q @ jnp.swapaxes(k, -2, -1)) * (float(D) ** -0.5)
    w = jax.nn.softmax(attn, axis=-1)
    return w @ v


if __name__ == "__main__":
    B, S_IMG, S_TXT, D = 2, 8, 8, 32

    key = jax.random.PRNGKey(0)
    k_img, k_txt, kq, kbq, kk, kbk, kv, kbv = jax.random.split(key, 8)

    img_feat = jax.random.normal(k_img, (B, S_IMG, D), dtype=jnp.float32)
    txt_feat = jax.random.normal(k_txt, (B, S_TXT, D), dtype=jnp.float32)

    # Deterministic PyTorch-style init: uniform(-1/sqrt(D), 1/sqrt(D)).
    bound = 1.0 / (D ** 0.5)
    params = {
        "wq": jax.random.uniform(kq, (D, D), jnp.float32, -bound, bound),
        "bq": jax.random.uniform(kbq, (D,), jnp.float32, -bound, bound),
        "wk": jax.random.uniform(kk, (D, D), jnp.float32, -bound, bound),
        "bk": jax.random.uniform(kbk, (D,), jnp.float32, -bound, bound),
        "wv": jax.random.uniform(kv, (D, D), jnp.float32, -bound, bound),
        "bv": jax.random.uniform(kbv, (D,), jnp.float32, -bound, bound),
    }

    prepared = prepare_params(params)   # one-time weight prep (not per-call)

    out = cross_modal_attention(img_feat, txt_feat, prepared)
    out = jax.block_until_ready(out)

    ref = _reference(img_feat, txt_feat, params)
    assert out.shape == (B, S_IMG, D)
    max_err = jnp.max(jnp.abs(out - ref))
    # Tolerance accounts for the EUP approximate reciprocal in the softmax.
    assert jnp.allclose(out, ref, atol=2e-3, rtol=2e-3), f"max err {max_err}"

    print("KERNEL_OK")
</pallas_src>

<mosaic_0001>
module attributes {stable_mosaic.version = 11 : i64} {
  func.func @_cross_attn_kernel(%arg0: i32, %arg1: memref<1x8x32xf32, #tpu.memory_space<vmem>>, %arg2: memref<1x8x32xf32, #tpu.memory_space<vmem>>, %arg3: memref<32x32xf32, #tpu.memory_space<vmem>>, %arg4: memref<1x32xf32, #tpu.memory_space<vmem>>, %arg5: memref<32x64xf32, #tpu.memory_space<vmem>>, %arg6: memref<1x64xf32, #tpu.memory_space<vmem>>, %arg7: memref<1x8x32xf32, #tpu.memory_space<vmem>>) attributes {dimension_semantics = [#tpu.dimension_semantics<parallel>], iteration_bounds = array<i64: 2>, scalar_prefetch = 0 : i64, scratch_operands = 0 : i64, tpu.core_type = #tpu.core_type<tc>, window_params = [{transform_indices = @transform_0, window_bounds = array<i64: 1, 8, 32>}, {transform_indices = @transform_1, window_bounds = array<i64: 1, 8, 32>}, {pipeline_mode = #tpu.pipeline_mode<synchronous>, transform_indices = @transform_2, window_bounds = array<i64: 32, 32>}, {pipeline_mode = #tpu.pipeline_mode<synchronous>, transform_indices = @transform_3, window_bounds = array<i64: 1, 32>}, {pipeline_mode = #tpu.pipeline_mode<synchronous>, transform_indices = @transform_4, window_bounds = array<i64: 32, 64>}, {pipeline_mode = #tpu.pipeline_mode<synchronous>, transform_indices = @transform_5, window_bounds = array<i64: 1, 64>}, {transform_indices = @transform_6, window_bounds = array<i64: 1, 8, 32>}]} {
    %c0 = arith.constant 0 : index
    %c0_0 = arith.constant 0 : index
    %c0_1 = arith.constant 0 : index
    %0 = vector.load %arg1[%c0, %c0_0, %c0_1] : memref<1x8x32xf32, #tpu.memory_space<vmem>>, vector<1x8x32xf32>
    %1 = vector.shape_cast %0 : vector<1x8x32xf32> to vector<8x32xf32>
    %c0_2 = arith.constant 0 : index
    %c0_3 = arith.constant 0 : index
    %c0_4 = arith.constant 0 : index
    %2 = vector.load %arg2[%c0_2, %c0_3, %c0_4] : memref<1x8x32xf32, #tpu.memory_space<vmem>>, vector<1x8x32xf32>
    %3 = vector.shape_cast %2 : vector<1x8x32xf32> to vector<8x32xf32>
    %c0_5 = arith.constant 0 : index
    %c0_6 = arith.constant 0 : index
    %4 = vector.load %arg3[%c0_5, %c0_6] : memref<32x32xf32, #tpu.memory_space<vmem>>, vector<32x32xf32>
    %cst = arith.constant dense<0.000000e+00> : vector<8x32xf32>
    %5 = tpu.matmul %1, %4, %cst {dimension_numbers = #tpu.dot_dimension_numbers<[1], [0], [0], [1], [0, 0, 1, 1], [], []>} : vector<8x32xf32>, vector<32x32xf32>, vector<8x32xf32> -> vector<8x32xf32>
    %c0_7 = arith.constant 0 : index
    %c0_8 = arith.constant 0 : index
    %6 = vector.load %arg4[%c0_7, %c0_8] : memref<1x32xf32, #tpu.memory_space<vmem>>, vector<1x32xf32>
    %7 = vector.broadcast %6 : vector<1x32xf32> to vector<8x32xf32>
    %8 = arith.addf %5, %7 : vector<8x32xf32>
    %9 = vector.shape_cast %8 : vector<8x32xf32> to vector<1x8x32xf32>
    %c0_9 = arith.constant 0 : index
    %c0_10 = arith.constant 0 : index
    %10 = vector.load %arg5[%c0_9, %c0_10] : memref<32x64xf32, #tpu.memory_space<vmem>>, vector<32x64xf32>
    %cst_11 = arith.constant dense<0.000000e+00> : vector<8x64xf32>
    %11 = tpu.matmul %3, %10, %cst_11 {dimension_numbers = #tpu.dot_dimension_numbers<[1], [0], [0], [1], [0, 0, 1, 1], [], []>} : vector<8x32xf32>, vector<32x64xf32>, vector<8x64xf32> -> vector<8x64xf32>
    %c0_12 = arith.constant 0 : index
    %c0_13 = arith.constant 0 : index
    %12 = vector.load %arg6[%c0_12, %c0_13] : memref<1x64xf32, #tpu.memory_space<vmem>>, vector<1x64xf32>
    %13 = vector.broadcast %12 : vector<1x64xf32> to vector<8x64xf32>
    %14 = arith.addf %11, %13 : vector<8x64xf32>
    %15 = vector.shape_cast %14 : vector<8x64xf32> to vector<1x8x64xf32>
    %16 = vector.extract_strided_slice %15 {offsets = [0, 0, 0], sizes = [1, 8, 32], strides = [1, 1, 1]} : vector<1x8x64xf32> to vector<1x8x32xf32>
    %17 = vector.extract_strided_slice %15 {offsets = [0, 0, 32], sizes = [1, 8, 32], strides = [1, 1, 1]} : vector<1x8x64xf32> to vector<1x8x32xf32>
    "tpu.trace_start"() <{level = 10 : i32, message = "bqd,bkd->bqk"}> : () -> ()
    %cst_14 = arith.constant dense<0.000000e+00> : vector<1x8x8xf32>
    %18 = tpu.matmul %9, %16, %cst_14 {dimension_numbers = #tpu.dot_dimension_numbers<[2], [2], [1], [1], [0, 0, 0, 1, 1, 1], [0], [0]>} : vector<1x8x32xf32>, vector<1x8x32xf32>, vector<1x8x8xf32> -> vector<1x8x8xf32>
    "tpu.trace_stop"() : () -> ()
    %cst_15 = arith.constant dense<0xFF800000> : vector<1x8xf32>
    %19 = vector.multi_reduction <maximumf>, %18, %cst_15 [2] : vector<1x8x8xf32> to vector<1x8xf32>
    %20 = vector.shape_cast %19 : vector<1x8xf32> to vector<1x8x1xf32>
    %21 = vector.broadcast %20 : vector<1x8x1xf32> to vector<1x8x8xf32>
    %22 = arith.subf %18, %21 : vector<1x8x8xf32>
    %23 = math.exp %22 : vector<1x8x8xf32>
    %cst_16 = arith.constant dense<0.000000e+00> : vector<1x8xf32>
    %24 = vector.multi_reduction <add>, %23, %cst_16 [2] : vector<1x8x8xf32> to vector<1x8xf32>
    %25 = vector.shape_cast %24 : vector<1x8xf32> to vector<1x8x1xf32>
    %26 = tpu.reciprocal %25 {approx = true} : vector<1x8x1xf32> -> vector<1x8x1xf32>
    %27 = vector.broadcast %26 : vector<1x8x1xf32> to vector<1x8x8xf32>
    %28 = arith.mulf %23, %27 : vector<1x8x8xf32>
    "tpu.trace_start"() <{level = 10 : i32, message = "bqk,bkd->bqd"}> : () -> ()
    %cst_17 = arith.constant dense<0.000000e+00> : vector<1x8x32xf32>
    %29 = tpu.matmul %28, %17, %cst_17 {dimension_numbers = #tpu.dot_dimension_numbers<[2], [1], [1], [2], [0, 0, 0, 1, 1, 2], [0], [0]>} : vector<1x8x8xf32>, vector<1x8x32xf32>, vector<1x8x32xf32> -> vector<1x8x32xf32>
    "tpu.trace_stop"() : () -> ()
    %c0_18 = arith.constant 0 : index
    %c0_19 = arith.constant 0 : index
    %c0_20 = arith.constant 0 : index
    %30 = vector.load %arg7[%c0_18, %c0_19, %c0_20] : memref<1x8x32xf32, #tpu.memory_space<vmem>>, vector<1x8x32xf32>
    tpu.vector_store %arg7[%c0_18, %c0_19, %c0_20], %29 {strides = array<i32>} : memref<1x8x32xf32, #tpu.memory_space<vmem>>, vector<1x8x32xf32>,
    return
  }
  func.func @transform_0(%arg0: i32) -> (i32, i32, i32) {
    %c0_i32 = arith.constant 0 : i32
    %c0_i32_0 = arith.constant 0 : i32
    %c0_i32_1 = arith.constant 0 : i32
    return %arg0, %c0_i32, %c0_i32_0 : i32, i32, i32
  }
  func.func @transform_1(%arg0: i32) -> (i32, i32, i32) {
    %c0_i32 = arith.constant 0 : i32
    %c0_i32_0 = arith.constant 0 : i32
    %c0_i32_1 = arith.constant 0 : i32
    return %arg0, %c0_i32, %c0_i32_0 : i32, i32, i32
  }
  func.func @transform_2(%arg0: i32) -> (i32, i32) {
    %c0_i32 = arith.constant 0 : i32
    %c0_i32_0 = arith.constant 0 : i32
    %c0_i32_1 = arith.constant 0 : i32
    return %c0_i32, %c0_i32_0 : i32, i32
  }
  func.func @transform_3(%arg0: i32) -> (i32, i32) {
    %c0_i32 = arith.constant 0 : i32
    %c0_i32_0 = arith.constant 0 : i32
    %c0_i32_1 = arith.constant 0 : i32
    return %c0_i32, %c0_i32_0 : i32, i32
  }
  func.func @transform_4(%arg0: i32) -> (i32, i32) {
    %c0_i32 = arith.constant 0 : i32
    %c0_i32_0 = arith.constant 0 : i32
    %c0_i32_1 = arith.constant 0 : i32
    return %c0_i32, %c0_i32_0 : i32, i32
  }
  func.func @transform_5(%arg0: i32) -> (i32, i32) {
    %c0_i32 = arith.constant 0 : i32
    %c0_i32_0 = arith.constant 0 : i32
    %c0_i32_1 = arith.constant 0 : i32
    return %c0_i32, %c0_i32_0 : i32, i32
  }
  func.func @transform_6(%arg0: i32) -> (i32, i32, i32) {
    %c0_i32 = arith.constant 0 : i32
    %c0_i32_0 = arith.constant 0 : i32
    %c0_i32_1 = arith.constant 0 : i32
    return %arg0, %c0_i32, %c0_i32_0 : i32, i32, i32
  }
}

</mosaic_0001>

<llo_original>
// kernel: tpu_custom_call.1
$region0: #{tpu_custom_call.1}
  #allocation0 [shape = 'u32[]', space=smem, size = 0x4, offset = 0x4, fixed_abs, tag = 'smem constant byte address 0x4 - core index']
  #allocation1 [shape = 'u32[72,128]{1,0:T(1,128)}', space=vmem, size = 0x9000, scoped, tag = 'internal scratch']
  %s0 = inlined_call_operand.hbm [shape: f32[2,8,32], index: 0, kind: input, shape index: {}]
  %s1 = inlined_call_operand.hbm [shape: f32[2,8,32], index: 1, kind: input, shape index: {}]
  %s2 = inlined_call_operand.hbm [shape: f32[32,32], index: 2, kind: input, shape index: {}]
  %s3 = inlined_call_operand.vmem [shape: f32[1,32], index: 3, kind: input, shape index: {}]
  %s4 = inlined_call_operand.hbm [shape: f32[32,64], index: 4, kind: input, shape index: {}]
  %s5 = inlined_call_operand.vmem [shape: f32[1,64], index: 5, kind: input, shape index: {}]
  %s6 = inlined_call_operand.hbm [shape: f32[2,8,32], index: 6, kind: output, shape index: {}]
  %s7 = sld [smem:[#allocation0]]
  $region73: #{tpu_custom_call.1} parent=0
    _
  %s9 = ssub.s32 1, %s7
  %s10 = scalar_select 0, %s9, %s7
  $region1: #{tpu_custom_call.1} parent=0
    #allocation2 [shape = 'u8[8192]{0}', space=vmem, size = 0x2000, scoped, tag = 'input window, operand 0']
    #allocation3 [shape = 's32[2]{0}', space=sflag, size = 0x8, scoped, tag = 'scoped memory for tpu_custom_call.1']
    #allocation4 [shape = 's32[2]{0}', space=sflag, size = 0x8, scoped, tag = 'scoped memory for tpu_custom_call.1']
    #allocation5 [shape = 'u8[8192]{0}', space=vmem, size = 0x2000, scoped, tag = 'input window, operand 1']
    #allocation6 [shape = 's32[2]{0}', space=sflag, size = 0x8, scoped, tag = 'scoped memory for tpu_custom_call.1']
    #allocation7 [shape = 'u8[16384]{0}', space=vmem, size = 0x4000, scoped, tag = 'input window, operand 2, single buffered']
    #allocation8 [shape = 'u8[16384]{0}', space=vmem, size = 0x4000, scoped, tag = 'input window, operand 4, single buffered']
    #allocation9 [shape = 's32[1]{0}', space=sflag, size = 0x4, scoped, tag = 'scoped memory for tpu_custom_call.1']
    #allocation10 [shape = 'u8[8192]{0}', space=vmem, size = 0x2000, scoped, tag = 'output window, operand 0']
    %11 = vsyncpa [#allocation3], 0
    %s12 = scalar_lea.sflag [#allocation3], 1
    %13 = vsyncpa %s12, 0
    %14 = vsyncpa [#allocation6], 0
    %s15 = scalar_lea.sflag [#allocation6], 1
    %16 = vsyncpa %s15, 0
    %17 = vsyncpa [#allocation9], 0
    %18 = vsyncpa [#allocation4], 0
    %s19 = scalar_lea.sflag [#allocation4], 1
    %20 = vsyncpa %s19, 0
    loop: start=0, step=1, limit=4
    $region2: #{tpu_custom_call.1} parent=1 // loop_pre_header
      _
    $region3: #{tpu_custom_call.1} parent=1 // loop_header
      %s22 = sphi 0, %s26
      %p23 = scmp.ge.s32.totalorder %s22, 4
      %s32 = sphi 0, %s34
      %s35 = sphi 0, %s32
      %s36 = sphi 0, %s35
      %s52 = sphi 0, %s36
      %s58 = sphi 0, %s60
      %s61 = sphi 0, %s58
      %s62 = sphi 0, %s61
      %s78 = sphi 0, %s62
      %s82 = sphi 0, %s82
      %s84 = sphi 0, %s82
      %s85 = sphi 0, %s84
      %s99 = sphi 0, %s85
      %s103 = sphi 0, %s103
      %s105 = sphi 0, %s103
      %s106 = sphi 0, %s105
      %s120 = sphi 0, %s106
      %s124 = sphi 0, %s124
      %s126 = sphi 0, %s124
      %s127 = sphi 0, %s126
      %s141 = sphi 0, %s127
      %s145 = sphi 0, %s145
      %s147 = sphi 0, %s145
      %s148 = sphi 0, %s147
      %s162 = sphi 0, %s148
      %s168 = sphi 0, %s170
      %s171 = sphi 0, %s168
      %s172 = sphi 0, %s171
      %s188 = sphi 0, %s172
    $region4: #{tpu_custom_call.1} parent=1 // loop_header_branch
      %25 = sbr.rel (%p23) target = $region8
    $region5: #{tpu_custom_call.1} parent=1 // loop_body
      %s27 = ssub.s32 %s22, 1
      %s28 = ssub.s32 %s22, 2
      %s29 = sadd.s32 %s22, 1
      %s30 = ssub.s32 %s22, %s29
      %p31 = scmp.eq.s32.totalorder %s30, 0
      %s33 = sadd.s32 %s32, 1
      %s34 = scalar_select %p31, %s32, %s33
      %p37 = pneg %p31
      %p38 = scmp.eq.s32.totalorder %s22, 1
      %p39 = por %p37, %p38
      %p40 = scmp.ne.s32.totalorder %s32, %s35
      %p41 = scmp.eq.s32.totalorder %s22, 0
      %p42 = por %p40, %p41
      %p43 = scmp.ne.s32.totalorder %s32, %s35
      %p44 = scmp.eq.s32.totalorder %s27, 1
      %p45 = por %p43, %p44
      %p46 = scmp.ne.s32.totalorder %s35, %s36
      %p47 = scmp.eq.s32.totalorder %s27, 0
      %p48 = por %p46, %p47
      %p49 = scmp.ne.s32.totalorder %s35, %s36
      %p50 = scmp.eq.s32.totalorder %s28, 1
      %p51 = por %p49, %p50
      %p53 = scmp.ne.s32.totalorder %s36, %s52
      %p54 = scmp.eq.s32.totalorder %s28, 0
      %p55 = por %p53, %p54
      %s56 = ssub.s32 %s22, %s29
      %p57 = scmp.eq.s32.totalorder %s56, 0
      %s59 = sadd.s32 %s58, 1
      %s60 = scalar_select %p57, %s58, %s59
      %p63 = pneg %p57
      %p64 = scmp.eq.s32.totalorder %s22, 1
      %p65 = por %p63, %p64
      %p66 = scmp.ne.s32.totalorder %s58, %s61
      %p67 = scmp.eq.s32.totalorder %s22, 0
      %p68 = por %p66, %p67
      %p69 = scmp.ne.s32.totalorder %s58, %s61
      %p70 = scmp.eq.s32.totalorder %s27, 1
      %p71 = por %p69, %p70
      %p72 = scmp.ne.s32.totalorder %s61, %s62
      %p73 = scmp.eq.s32.totalorder %s27, 0
      %p74 = por %p72, %p73
      %p75 = scmp.ne.s32.totalorder %s61, %s62
      %p76 = scmp.eq.s32.totalorder %s28, 1
      %p77 = por %p75, %p76
      %p79 = scmp.ne.s32.totalorder %s62, %s78
      %p80 = scmp.eq.s32.totalorder %s28, 0
      %p81 = por %p79, %p80
      %s83 = sadd.s32 %s82, 1
      %p86 = scmp.eq.s32.totalorder %s22, 1
      %p87 = scmp.ne.s32.totalorder %s82, %s84
      %p88 = scmp.eq.s32.totalorder %s22, 0
      %p89 = por %p87, %p88
      %p90 = scmp.ne.s32.totalorder %s82, %s84
      %p91 = scmp.eq.s32.totalorder %s27, 1
      %p92 = por %p90, %p91
      %p93 = scmp.ne.s32.totalorder %s84, %s85
      %p94 = scmp.eq.s32.totalorder %s27, 0
      %p95 = por %p93, %p94
      %p96 = scmp.ne.s32.totalorder %s84, %s85
      %p97 = scmp.eq.s32.totalorder %s28, 1
      %p98 = por %p96, %p97
      %p100 = scmp.ne.s32.totalorder %s85, %s99
      %p101 = scmp.eq.s32.totalorder %s28, 0
      %p102 = por %p100, %p101
      %s104 = sadd.s32 %s103, 1
      %p107 = scmp.eq.s32.totalorder %s22, 1
      %p108 = scmp.ne.s32.totalorder %s103, %s105
      %p109 = scmp.eq.s32.totalorder %s22, 0
      %p110 = por %p108, %p109
      %p111 = scmp.ne.s32.totalorder %s103, %s105
      %p112 = scmp.eq.s32.totalorder %s27, 1
      %p113 = por %p111, %p112
      %p114 = scmp.ne.s32.totalorder %s105, %s106
      %p115 = scmp.eq.s32.totalorder %s27, 0
      %p116 = por %p114, %p115
      %p117 = scmp.ne.s32.totalorder %s105, %s106
      %p118 = scmp.eq.s32.totalorder %s28, 1
      %p119 = por %p117, %p118
      %p121 = scmp.ne.s32.totalorder %s106, %s120
      %p122 = scmp.eq.s32.totalorder %s28, 0
      %p123 = por %p121, %p122
      %s125 = sadd.s32 %s124, 1
      %p128 = scmp.eq.s32.totalorder %s22, 1
      %p129 = scmp.ne.s32.totalorder %s124, %s126
      %p130 = scmp.eq.s32.totalorder %s22, 0
      %p131 = por %p129, %p130
      %p132 = scmp.ne.s32.totalorder %s124, %s126
      %p133 = scmp.eq.s32.totalorder %s27, 1
      %p134 = por %p132, %p133
      %p135 = scmp.ne.s32.totalorder %s126, %s127
      %p136 = scmp.eq.s32.totalorder %s27, 0
      %p137 = por %p135, %p136
      %p138 = scmp.ne.s32.totalorder %s126, %s127
      %p139 = scmp.eq.s32.totalorder %s28, 1
      %p140 = por %p138, %p139
      %p142 = scmp.ne.s32.totalorder %s127, %s141
      %p143 = scmp.eq.s32.totalorder %s28, 0
      %p144 = por %p142, %p143
      %s146 = sadd.s32 %s145, 1
      %p149 = scmp.eq.s32.totalorder %s22, 1
      %p150 = scmp.ne.s32.totalorder %s145, %s147
      %p151 = scmp.eq.s32.totalorder %s22, 0
      %p152 = por %p150, %p151
      %p153 = scmp.ne.s32.totalorder %s145, %s147
      %p154 = scmp.eq.s32.totalorder %s27, 1
      %p155 = por %p153, %p154
      %p156 = scmp.ne.s32.totalorder %s147, %s148
      %p157 = scmp.eq.s32.totalorder %s27, 0
      %p158 = por %p156, %p157
      %p159 = scmp.ne.s32.totalorder %s147, %s148
      %p160 = scmp.eq.s32.totalorder %s28, 1
      %p161 = por %p159, %p160
      %p163 = scmp.ne.s32.totalorder %s148, %s162
      %p164 = scmp.eq.s32.totalorder %s28, 0
      %p165 = por %p163, %p164
      %s166 = ssub.s32 %s22, %s29
      %p167 = scmp.eq.s32.totalorder %s166, 0
      %s169 = sadd.s32 %s168, 1
      %s170 = scalar_select %p167, %s168, %s169
      %p173 = pneg %p167
      %p174 = scmp.eq.s32.totalorder %s22, 1
      %p175 = por %p173, %p174
      %p176 = scmp.ne.s32.totalorder %s168, %s171
      %p177 = scmp.eq.s32.totalorder %s22, 0
      %p178 = por %p176, %p177
      %p179 = scmp.ne.s32.totalorder %s168, %s171
      %p180 = scmp.eq.s32.totalorder %s27, 1
      %p181 = por %p179, %p180
      %p182 = scmp.ne.s32.totalorder %s171, %s172
      %p183 = scmp.eq.s32.totalorder %s27, 0
      %p184 = por %p182, %p183
      %p185 = scmp.ne.s32.totalorder %s171, %s172
      %p186 = scmp.eq.s32.totalorder %s28, 1
      %p187 = por %p185, %p186
      %p189 = scmp.ne.s32.totalorder %s172, %s188
      %p190 = scmp.eq.s32.totalorder %s28, 0
      %p191 = por %p189, %p190
      %p192 = scmp.le.s32.totalorder 1, %s22
      %p193 = scmp.lt.s32.totalorder %s22, 3
      %p194 = pnand %p192, %p193
      %p195 = pneg %p194
      // Predicated region
      $region9: #{tpu_custom_call.1} parent=5 // pred_check
        _
      $region10: #{tpu_custom_call.1} parent=5 // pred_check_branch
        %197 = sbr.rel (%p194) target = $region12
      $region11: #{tpu_custom_call.1} parent=5 // pred_region
        %s198 = ssub.s32 %s22, 1
        // Predicated region
        $region13: #{tpu_custom_call.1} parent=11 // pred_check
          %p199 = pneg %p95
        $region14: #{tpu_custom_call.1} parent=11 // pred_check_branch
          %201 = sbr.rel (%p199) target = $region16
        $region15: #{tpu_custom_call.1} parent=11 // pred_region
          %203 = vsyncadd [#allocation6], 0
          %s204 = sshll.u32 %s2, 4
          %s205 = int_to_ptr.hbm [resolvable:$true] %s204
          %s206 = sshll.u32 [#allocation7], 4
          %s207 = int_to_ptr.vmem [resolvable:$true] %s206
          %212 = dma.hbm_to_vmem [thread:$0]  %s205, 512, %s207, [#allocation6], 128, 128, 8
        $region16: #{tpu_custom_call.1} parent=11 // pred_fallthru
          _
        // Predicated region
        $region17: #{tpu_custom_call.1} parent=11 // pred_check
          %p213 = pneg %p116
        $region18: #{tpu_custom_call.1} parent=11 // pred_check_branch
          %215 = sbr.rel (%p213) target = $region20
        $region19: #{tpu_custom_call.1} parent=11 // pred_region
          _
        $region20: #{tpu_custom_call.1} parent=11 // pred_fallthru
          _
        // Predicated region
        $region21: #{tpu_custom_call.1} parent=11 // pred_check
          %p216 = pneg %p137
        $region22: #{tpu_custom_call.1} parent=11 // pred_check_branch
          %218 = sbr.rel (%p216) target = $region24
        $region23: #{tpu_custom_call.1} parent=11 // pred_region
          %220 = vsyncadd [#allocation9], 0
          %s221 = sshll.u32 %s4, 4
          %s222 = int_to_ptr.hbm [resolvable:$true] %s221
          %s223 = sshll.u32 [#allocation8], 4
          %s224 = int_to_ptr.vmem [resolvable:$true] %s223
          %229 = dma.hbm_to_vmem [thread:$0]  %s222, 512, %s224, [#allocation9], 128, 128, 8
        $region24: #{tpu_custom_call.1} parent=11 // pred_fallthru
          _
        // Predicated region
        $region25: #{tpu_custom_call.1} parent=11 // pred_check
          %p230 = pneg %p158
        $region26: #{tpu_custom_call.1} parent=11 // pred_check_branch
          %232 = sbr.rel (%p230) target = $region28
        $region27: #{tpu_custom_call.1} parent=11 // pred_region
          _
        $region28: #{tpu_custom_call.1} parent=11 // pred_fallthru
          _
      $region12: #{tpu_custom_call.1} parent=5 // pred_fallthru
        _
      %p233 = scmp.lt.s32.totalorder %s22, 2
      // Predicated region
      $region29: #{tpu_custom_call.1} parent=5 // pred_check
        %p234 = pneg %p233
      $region30: #{tpu_custom_call.1} parent=5 // pred_check_branch
        %236 = sbr.rel (%p234) target = $region32
      $region31: #{tpu_custom_call.1} parent=5 // pred_region
        // Predicated region
        $region33: #{tpu_custom_call.1} parent=31 // pred_check
          %p237 = pneg %p42
        $region34: #{tpu_custom_call.1} parent=31 // pred_check_branch
          %239 = sbr.rel (%p237) target = $region36
        $region35: #{tpu_custom_call.1} parent=31 // pred_region
          %s240 = sand.u32 %s32, 1
          %s241 = scalar_lea.sflag [#allocation3], %s240
          %s242 = sand.u32 %s32, 1
          %s243 = smul.addr %s242, 8
          %s244 = scalar_lea.vmem [#allocation2], %s243
          %246 = vsyncadd %s241, 0
          %s247 = smul.addr %s22, 8
          %s248 = scalar_lea.hbm %s0, %s247
          %s250 = sshll.u32 %s248, 4
          %s251 = int_to_ptr.hbm [resolvable:$true] %s250
          %s252 = sshll.u32 %s244, 4
          %s253 = int_to_ptr.vmem [resolvable:$true] %s252
          %255 = dma.hbm_to_vmem [thread:$0]  %s251, 128, %s253, %s241
        $region36: #{tpu_custom_call.1} parent=31 // pred_fallthru
          _
        // Predicated region
        $region37: #{tpu_custom_call.1} parent=31 // pred_check
          %p256 = pneg %p68
        $region38: #{tpu_custom_call.1} parent=31 // pred_check_branch
          %258 = sbr.rel (%p256) target = $region40
        $region39: #{tpu_custom_call.1} parent=31 // pred_region
          %s259 = sand.u32 %s22, 1
          %s260 = scalar_lea.sflag [#allocation6], %s259
          %s261 = sand.u32 %s58, 1
          %s262 = smul.addr %s261, 8
          %s263 = scalar_lea.vmem [#allocation5], %s262
          %265 = vsyncadd %s260, 0
          %s266 = smul.addr %s22, 8
          %s267 = scalar_lea.hbm %s1, %s266
          %s269 = sshll.u32 %s267, 4
          %s270 = int_to_ptr.hbm [resolvable:$true] %s269
          %s271 = sshll.u32 %s263, 4
          %s272 = int_to_ptr.vmem [resolvable:$true] %s271
          %274 = dma.hbm_to_vmem [thread:$0]  %s270, 128, %s272, %s260
        $region40: #{tpu_custom_call.1} parent=31 // pred_fallthru
          _
      $region32: #{tpu_custom_call.1} parent=5 // pred_fallthru
        _
      %p275 = scmp.le.s32.totalorder 1, %s22
      %p276 = scmp.lt.s32.totalorder %s22, 3
      %p277 = pnand %p275, %p276
      %p278 = pneg %p277
      // Predicated region
      $region41: #{tpu_custom_call.1} parent=5 // pred_check
        _
      $region42: #{tpu_custom_call.1} parent=5 // pred_check_branch
        %280 = sbr.rel (%p277) target = $region44
      $region43: #{tpu_custom_call.1} parent=5 // pred_region
        %s281 = ssub.s32 %s22, 1
        %s282 = sand.u32 %s35, 1
        %s283 = scalar_lea.sflag [#allocation3], %s282
        %s284 = sand.u32 %s35, 1
        %s285 = smul.addr %s284, 8
        %s286 = scalar_lea.vmem [#allocation2], %s285
        // Predicated region
        $region45: #{tpu_custom_call.1} parent=43 // pred_check
          %p287 = pneg %p48
        $region46: #{tpu_custom_call.1} parent=43 // pred_check_branch
          %289 = sbr.rel (%p287) target = $region48
        $region47: #{tpu_custom_call.1} parent=43 // pred_region
          %291 = dma.done %s283, 128
        $region48: #{tpu_custom_call.1} parent=43 // pred_fallthru
          _
        %s292 = sand.u32 %s27, 1
        %s293 = scalar_lea.sflag [#allocation6], %s292
        %s294 = sand.u32 %s61, 1
        %s295 = smul.addr %s294, 8
        %s296 = scalar_lea.vmem [#allocation5], %s295
        // Predicated region
        $region49: #{tpu_custom_call.1} parent=43 // pred_check
          %p297 = pneg %p74
        $region50: #{tpu_custom_call.1} parent=43 // pred_check_branch
          %299 = sbr.rel (%p297) target = $region52
        $region51: #{tpu_custom_call.1} parent=43 // pred_region
          %301 = dma.done %s293, 128
        $region52: #{tpu_custom_call.1} parent=43 // pred_fallthru
          _
        // Predicated region
        $region53: #{tpu_custom_call.1} parent=43 // pred_check
          %p302 = pneg %p95
        $region54: #{tpu_custom_call.1} parent=43 // pred_check_branch
          %304 = sbr.rel (%p302) target = $region56
        $region55: #{tpu_custom_call.1} parent=43 // pred_region
          %306 = dma.done [#allocation6], 512
        $region56: #{tpu_custom_call.1} parent=43 // pred_fallthru
          _
        // Predicated region
        $region57: #{tpu_custom_call.1} parent=43 // pred_check
          %p307 = pneg %p137
        $region58: #{tpu_custom_call.1} parent=43 // pred_check_branch
          %309 = sbr.rel (%p307) target = $region60
        $region59: #{tpu_custom_call.1} parent=43 // pred_region
          %311 = dma.done [#allocation9], 512
        $region60: #{tpu_custom_call.1} parent=43 // pred_fallthru
          _
        %s312 = sand.u32 %s35, 1
        %s313 = scalar_lea.sflag [#allocation3], %s312
        %s314 = sand.u32 %s35, 1
        %s315 = smul.addr %s314, 8
        %s316 = scalar_lea.vmem [#allocation2], %s315
        %p317 = pneg %p48
        %p318 = pneg %p45
        %s319 = sand.u32 %s27, 1
        %s320 = scalar_lea.sflag [#allocation6], %s319
        %s321 = sand.u32 %s61, 1
        %s322 = smul.addr %s321, 8
        %s323 = scalar_lea.vmem [#allocation5], %s322
        %p324 = pneg %p74
        %p325 = pneg %p71
        %p326 = pneg %p95
        %p327 = pneg %p92
        %p328 = pneg %p116
        %p329 = pneg %p113
        %p330 = pneg %p137
        %p331 = pneg %p134
        %p332 = pneg %p158
        %p333 = pneg %p155
        %p334 = pneg %p184
        %p335 = pneg %p181
        %s336 = sand.u32 %s171, 1
        %s337 = scalar_lea.sflag [#allocation4], %s336
        %s338 = sand.u32 %s171, 1
        %s339 = smul.addr %s338, 8
        %s340 = scalar_lea.vmem [#allocation10], %s339
        %v341 = vld [vmem:[%s286] sm:$0xff]
        %v342 = vld [vmem:[%s296] sm:$0xff]
        %v343 = vld [vmem:[#allocation7] sm:$0xff]
        %v344 = vld [vmem:[#allocation7 + $0x8] sm:$0xff]
        %v345 = vld [vmem:[#allocation7 + $0x10] sm:$0xff]
        %v346 = vld [vmem:[#allocation7 + $0x18] sm:$0xff]
        %v347 = vld [vmem:[%s3] sm:$0x1]
        %v349 = vperm.slane %v347, 0
        %vm351 = vcmask 261120
        %v353 = vsel %vm351, %v341, 0
        %355 = vmatpush.msra.mxu0 0.0
        %356 = vmatpush.msra.mxu0 0.0
        %357 = vmatpush.msra.mxu0 0.0
        %358 = vmatpush.msra.mxu0 0.0
        %359 = vmatpush.msra.mxu0 0.0
        %360 = vmatpush.msra.mxu0 0.0
        %361 = vmatpush.msra.mxu0 0.0
        %362 = vmatpush.msra.mxu0 0.0
        %363 = vmatpush.msra.mxu0 0.0
        %364 = vmatpush.msra.mxu0 0.0
        %365 = vmatpush.msra.mxu0 0.0
        %366 = vmatpush.msra.mxu0 0.0
        %367 = vmatpush.msra.mxu0 %v346
        %368 = vmatpush.msra.mxu0 %v345
        %369 = vmatpush.msra.mxu0 %v344
        %370 = vmatpush.msra.mxu0 %v343
        %371 = vmatmul.f32.gmra.mxu0 %v353
        %v372 = vpop.f32.mrf.mxu0
        %v373 = vadd.f32 %v349, %v372
        %374 = vdwg.mxu0
        %v375 = vld [vmem:[#allocation8] sm:$0xff]
        %v376 = vld [vmem:[#allocation8 + $0x8] sm:$0xff]
        %v377 = vld [vmem:[#allocation8 + $0x10] sm:$0xff]
        %v378 = vld [vmem:[#allocation8 + $0x18] sm:$0xff]
        %v379 = vld [vmem:[%s5] sm:$0x1]
        %v381 = vperm.slane %v379, 0
        %v384 = vsel %vm351, %v342, 0
        %386 = vmatpush.msra.mxu0 0.0
        %387 = vmatpush.msra.mxu0 0.0
        %388 = vmatpush.msra.mxu0 0.0
        %389 = vmatpush.msra.mxu0 0.0
        %390 = vmatpush.msra.mxu0 0.0
        %391 = vmatpush.msra.mxu0 0.0
        %392 = vmatpush.msra.mxu0 0.0
        %393 = vmatpush.msra.mxu0 0.0
        %394 = vmatpush.msra.mxu0 0.0
        %395 = vmatpush.msra.mxu0 0.0
        %396 = vmatpush.msra.mxu0 0.0
        %397 = vmatpush.msra.mxu0 0.0
        %398 = vmatpush.msra.mxu0 %v378
        %399 = vmatpush.msra.mxu0 %v377
        %400 = vmatpush.msra.mxu0 %v376
        %401 = vmatpush.msra.mxu0 %v375
        %402 = vmatmul.f32.gmra.mxu0 %v384
        %v403 = vpop.f32.mrf.mxu0
        %v404 = vadd.f32 %v381, %v403
        %405 = vdwg.mxu0
        %v407 = vsel %vm351, %v373, 0
        %v410 = vsel %vm351, %v404, 0
        %412 = vmatpush.xpose.msra.mxu0 0.0
        %413 = vmatpush.xpose.msra.mxu0 0.0
        %414 = vmatpush.xpose.msra.mxu0 0.0
        %415 = vmatpush.xpose.msra.mxu0 0.0
        %416 = vmatpush.xpose.msra.mxu0 0.0
        %417 = vmatpush.xpose.msra.mxu0 0.0
        %418 = vmatpush.xpose.msra.mxu0 0.0
        %419 = vmatpush.xpose.msra.mxu0 0.0
        %420 = vmatpush.xpose.msra.mxu0 0.0
        %421 = vmatpush.xpose.msra.mxu0 0.0
        %422 = vmatpush.xpose.msra.mxu0 0.0
        %423 = vmatpush.xpose.msra.mxu0 0.0
        %424 = vmatpush.xpose.msra.mxu0 0.0
        %425 = vmatpush.xpose.msra.mxu0 0.0
        %426 = vmatpush.xpose.msra.mxu0 0.0
        %427 = vmatpush.xpose.msra.mxu0 %v410
        %428 = vmatmul.f32.gmra.mxu0 %v407
        %v429 = vpop.f32.mrf.mxu0
        %v430 = vadd.f32 0.0, %v429
        %431 = vdwg.mxu0
        %vm432 = vcmask 64512
        %v433 = vsel %vm432, %v430, -inf
        %434 = vmax.xlane.f32.xlu0 %v433
        %v435 = vpop.xlane.xlu0 %434
        %v436 = vsub.f32 %v430, %v435
        %v437 = vmul.f32 %v436, 1.442695
        %v438 = vpow.pop %v437
        %v439 = vsel %vm432, %v438, 0.0
        %440 = vadd.xlane.f32.xlu0 %v439
        %v441 = vpop.xlane.xlu0 %440
        %v442 = vrcp.pop %v441
        %v443 = vmul.f32 %v438, %v442
        %444 = vrot.lane.b32.xlu0 %v404, 96
        %v445 = vpop.permute.xlu0 %444
        %v448 = vsel %vm432, %v443, 0
        %450 = vmatpush.msra.mxu0 0.0
        %451 = vmatpush.msra.mxu0 0.0
        %452 = vmatpush.msra.mxu0 0.0
        %453 = vmatpush.msra.mxu0 0.0
        %454 = vmatpush.msra.mxu0 0.0
        %455 = vmatpush.msra.mxu0 0.0
        %456 = vmatpush.msra.mxu0 0.0
        %457 = vmatpush.msra.mxu0 0.0
        %458 = vmatpush.msra.mxu0 0.0
        %459 = vmatpush.msra.mxu0 0.0
        %460 = vmatpush.msra.mxu0 0.0
        %461 = vmatpush.msra.mxu0 0.0
        %462 = vmatpush.msra.mxu0 0.0
        %463 = vmatpush.msra.mxu0 0.0
        %464 = vmatpush.msra.mxu0 0.0
        %465 = vmatpush.msra.mxu0 %v445
        %466 = vmatmul.f32.gmra.mxu0 %v448
        %v467 = vpop.f32.mrf.mxu0
        %v468 = vadd.f32 0.0, %v467
        %469 = vdwg.mxu0
        %470 = vst.msk [vmem:[%s340] sm:$0xff] %vm351, %v468
        %s471 = sand.u32 %s171, 1
        %s472 = scalar_lea.sflag [#allocation4], %s471
        %s473 = sand.u32 %s171, 1
        %s474 = smul.addr %s473, 8
        %s475 = scalar_lea.vmem [#allocation10], %s474
        // Predicated region
        $region61: #{tpu_custom_call.1} parent=43 // pred_check
          %p476 = pneg %p181
        $region62: #{tpu_custom_call.1} parent=43 // pred_check_branch
          %478 = sbr.rel (%p476) target = $region64
        $region63: #{tpu_custom_call.1} parent=43 // pred_region
          %480 = vsyncadd %s472, 0
          %s481 = smul.addr %s27, 8
          %s482 = scalar_lea.hbm %s6, %s481
          %s484 = sshll.u32 %s475, 4
          %s485 = int_to_ptr.vmem [resolvable:$true] %s484
          %s486 = sshll.u32 %s482, 4
          %s487 = int_to_ptr.hbm [resolvable:$true] %s486
          %489 = dma.vmem_to_hbm [thread:$0]  %s485, 128, %s487, %s472
        $region64: #{tpu_custom_call.1} parent=43 // pred_fallthru
          _
      $region44: #{tpu_custom_call.1} parent=5 // pred_fallthru
        _
      %p490 = scmp.le.s32.totalorder 2, %s22
      // Predicated region
      $region65: #{tpu_custom_call.1} parent=5 // pred_check
        %p491 = pneg %p490
      $region66: #{tpu_custom_call.1} parent=5 // pred_check_branch
        %493 = sbr.rel (%p491) target = $region68
      $region67: #{tpu_custom_call.1} parent=5 // pred_region
        %s494 = ssub.s32 %s22, 2
        // Predicated region
        $region69: #{tpu_custom_call.1} parent=67 // pred_check
          %p495 = pneg %p187
        $region70: #{tpu_custom_call.1} parent=67 // pred_check_branch
          %497 = sbr.rel (%p495) target = $region72
        $region71: #{tpu_custom_call.1} parent=67 // pred_region
          %s498 = sand.u32 %s172, 1
          %s499 = scalar_lea.sflag [#allocation4], %s498
          %s500 = sand.u32 %s172, 1
          %s501 = smul.addr %s500, 8
          %s502 = scalar_lea.vmem [#allocation10], %s501
          %504 = dma.done %s499, 128
        $region72: #{tpu_custom_call.1} parent=67 // pred_fallthru
          _
      $region68: #{tpu_custom_call.1} parent=5 // pred_fallthru
        _
    $region6: #{tpu_custom_call.1} parent=1 // loop_footer
      %s26 = sadd.s32 1, %s22
    $region7: #{tpu_custom_call.1} parent=1 // loop_footer_branch
      %21 = sbr.rel target = $region3
    $region8: #{tpu_custom_call.1} parent=1 // loop_exit
      _
    %505 = vsyncpa [#allocation3], 1
    %s506 = scalar_lea.sflag [#allocation3], 1
    %507 = vsyncpa %s506, 1
    %508 = vsyncpa [#allocation6], 1
    %s509 = scalar_lea.sflag [#allocation6], 1
    %510 = vsyncpa %s509, 1
    %511 = vsyncpa [#allocation9], 1
    %512 = vsyncpa [#allocation4], 1
    %s513 = scalar_lea.sflag [#allocation4], 1
    %514 = vsyncpa %s513, 1

</llo_original>
